<compile_context>
chip_gen: v5e
topology: v5e:2x2
jax: 0.10.0
libtpu: 0.0.40
codegen_flags: <defaults>
</compile_context>

<pallas_src>
import functools

import jax
import jax.numpy as jnp
from jax import lax
from jax.experimental import pallas as pl
from jax.experimental.pallas import tpu as pltpu

# Small, module-consistent shapes.
B = 8            # batch (demo)
F = 32           # input feature dim
H = 32           # hidden dim of each individual learner
C = 8            # per-learner output dim -> meta output dim
L = 4            # number of individual learners -> meta input dim = L*C = 32
LH = L * H       # 128  (fused hidden width == lane count: fully lane-dense)
LANES = 128
TB = 8           # batch tile (multiple of 8; raise to >=512 for big batches)

# Packed parameter slab layout (rows; every section start is 8-aligned).
ROW_W1 = 0                 # rows [0, 32)    : W1_all   (F, LH)
ROW_B1 = F                 # row  32         : b1_all   (1, LH)
ROW_WF = 40                # rows [40, 168)  : W_fold2  (LH, LANES) un-transposed
ROW_BF = ROW_WF + LH       # row  168        : b_fold2  (1, LANES)
SLAB_ROWS = ROW_BF + 8     # 176, padded to a multiple of 8 sublanes


def elamd_kernel(x_ref, slab_ref, out_ref):
    x = x_ref[...]                                        # (TB, F)

    w1 = slab_ref[ROW_W1:ROW_W1 + F, :]                   # (F, LH)   lane-dense
    b1 = slab_ref[ROW_B1:ROW_B1 + 1, :]                   # (1, LH)
    wf = slab_ref[ROW_WF:ROW_WF + LH, :]                  # (LH, 128) pre-oriented
    bf = slab_ref[ROW_BF:ROW_BF + 1, :]                   # (1, 128)

    # --- all L individual learners, first layer fused (MXU push #1) ---
    h = jnp.dot(x, w1, preferred_element_type=jnp.float32) + b1
    h = jnp.maximum(h, 0.0)                               # ReLU, (TB, LH)

    # --- block-diag 2nd layer + meta learner + anomaly head, all folded
    #     offline into one canonical-orientation matmul (MXU push #2) ---
    z = jnp.dot(h, wf, preferred_element_type=jnp.float32) + bf     # (TB, 128)
    # lanes 0:C = meta_output, lane C = anomaly logit, rest = 0.

    # Sigmoid only on the anomaly lane (EUP; other lanes pass through).
    lane = lax.broadcasted_iota(jnp.int32, z.shape, 1)
    out_ref[...] = jnp.where(lane == C, jax.nn.sigmoid(z), z)
    # TODO(synk): sklearn-style (non-nn.Module) predict_proba / predict
    # branches of the PyTorch module have no Pallas equivalent.


@functools.partial(jax.jit, static_argnames=("tb",))
def elamd_forward(x, slab, tb=TB):
    b = x.shape[0]
    bp = ((b + tb - 1) // tb) * tb
    if bp != b:
        x = jnp.pad(x, ((0, bp - b), (0, 0)))
    nsteps = bp // tb

    cost = pl.CostEstimate(
        flops=2 * bp * (F * LH + LH * LANES),
        transcendentals=bp * LANES,
        bytes_accessed=(bp * F + SLAB_ROWS * LANES + bp * LANES) * 4,
    )

    out = pl.pallas_call(
        elamd_kernel,
        out_shape=jax.ShapeDtypeStruct((bp, LANES), jnp.float32),
        grid_spec=pltpu.PrefetchScalarGridSpec(
            num_scalar_prefetch=0,
            grid=(nsteps,),
            in_specs=[
                pl.BlockSpec((tb, F), lambda i: (i, 0)),
                # Constant index_map: slab DMA'd once, resident across steps.
                pl.BlockSpec((SLAB_ROWS, LANES), lambda i: (0, 0)),
            ],
            out_specs=pl.BlockSpec((tb, LANES), lambda i: (i, 0)),
        ),
        compiler_params=pltpu.CompilerParams(
            dimension_semantics=("parallel",)),
        cost_estimate=cost,
    )(x, slab)

    meta_output = out[:b, 0:C]
    anomaly_output = out[:b, C:C + 1]
    return meta_output, anomaly_output


def make_params(key):
    """Original (unfused) per-learner parameters, as the PyTorch module holds."""
    ks = jax.random.split(key, 8)
    scale = 0.1
    w1 = scale * jax.random.normal(ks[0], (L, F, H), jnp.float32)
    b1 = scale * jax.random.normal(ks[1], (L, 1, H), jnp.float32)
    w2 = scale * jax.random.normal(ks[2], (L, H, C), jnp.float32)
    b2 = scale * jax.random.normal(ks[3], (L, 1, C), jnp.float32)
    wm = scale * jax.random.normal(ks[4], (L * C, C), jnp.float32)
    bm = scale * jax.random.normal(ks[5], (1, C), jnp.float32)
    wa = scale * jax.random.normal(ks[6], (C, 1), jnp.float32)
    ba = scale * jax.random.normal(ks[7], (1, 1), jnp.float32)
    return w1, b1, w2, b2, wm, bm, wa, ba


def pack_params(w1, b1, w2, b2, wm, bm, wa, ba):
    """One-time offline repack into a single lane-dense (SLAB_ROWS, 128) slab."""
    # Fused first layer: (F, L*H) and (1, L*H).
    W1_all = jnp.concatenate([w1[i] for i in range(L)], axis=1)      # (F, LH)
    b1_all = jnp.concatenate([b1[i] for i in range(L)], axis=1)      # (1, LH)

    # Block-diagonal second layer (replaces per-learner matmuls + concat).
    W2_bd = jnp.zeros((LH, L * C), jnp.float32)
    for i in range(L):
        W2_bd = W2_bd.at[i * H:(i + 1) * H, i * C:(i + 1) * C].set(w2[i])
    b2_cat = jnp.concatenate([b2[i] for i in range(L)], axis=1)      # (1, L*C)

    # Fold the meta learner (associativity of affine maps).
    W_fold = W2_bd @ wm                                              # (LH, C)
    b_fold = b2_cat @ wm + bm                                        # (1, C)

    # Fold the anomaly head: logit = meta @ wa + ba = h @ (W_fold @ wa) + ...
    wa_col = W_fold @ wa                                             # (LH, 1)
    ba_fold = b_fold @ wa + ba                                       # (1, 1)

    # Lane-padded, un-transposed second-stage weight: [meta cols | logit | 0].
    W_fold2 = jnp.zeros((LH, LANES), jnp.float32)
    W_fold2 = W_fold2.at[:, 0:C].set(W_fold)
    W_fold2 = W_fold2.at[:, C].set(wa_col[:, 0])
    b_fold2 = jnp.zeros((1, LANES), jnp.float32)
    b_fold2 = b_fold2.at[0, 0:C].set(b_fold[0])
    b_fold2 = b_fold2.at[0, C].set(ba_fold[0, 0])

    slab = jnp.zeros((SLAB_ROWS, LANES), jnp.float32)
    slab = slab.at[ROW_W1:ROW_W1 + F, :].set(W1_all)
    slab = slab.at[ROW_B1, :].set(b1_all[0])
    slab = slab.at[ROW_WF:ROW_WF + LH, :].set(W_fold2)
    slab = slab.at[ROW_BF, :].set(b_fold2[0])
    return slab


def reference_forward(x, w1, b1, w2, b2, wm, bm, wa, ba):
    """Pure-JAX reference of the ORIGINAL (unfused) module forward."""
    outs = []
    for i in range(L):
        h = jnp.maximum(x @ w1[i] + b1[i], 0.0)
        outs.append(h @ w2[i] + b2[i])
    meta_in = jnp.concatenate(outs, axis=1)
    meta = meta_in @ wm + bm
    anom = jax.nn.sigmoid(meta @ wa + ba)
    return meta, anom


if __name__ == "__main__":
    key = jax.random.PRNGKey(0)
    kx, kp = jax.random.split(key)
    x = jax.random.normal(kx, (B, F), jnp.float32)
    params = make_params(kp)
    slab = pack_params(*params)

    meta_out, anom_out = elamd_forward(x, slab)
    jax.block_until_ready((meta_out, anom_out))

    ref_meta, ref_anom = reference_forward(x, *params)
    assert meta_out.shape == (B, C) and anom_out.shape == (B, 1)
    # Offline meta/anomaly folds rely on f32 reassociation: allow ~1e-4.
    assert jnp.allclose(meta_out, ref_meta, atol=1e-4, rtol=1e-4)
    assert jnp.allclose(anom_out, ref_anom, atol=1e-4, rtol=1e-4)

    print("KERNEL_OK")
</pallas_src>

<mosaic_0001>
module attributes {stable_mosaic.version = 11 : i64} {
  func.func @elamd_kernel(%arg0: i32, %arg1: memref<8x32xf32, #tpu.memory_space<vmem>>, %arg2: memref<176x128xf32, #tpu.memory_space<vmem>>, %arg3: memref<8x128xf32, #tpu.memory_space<vmem>>) attributes {dimension_semantics = [#tpu.dimension_semantics<parallel>], iteration_bounds = array<i64: 1>, scalar_prefetch = 0 : i64, scratch_operands = 0 : i64, tpu.core_type = #tpu.core_type<tc>, window_params = [{transform_indices = @transform_0, window_bounds = array<i64: 8, 32>}, {pipeline_mode = #tpu.pipeline_mode<synchronous>, transform_indices = @transform_1, window_bounds = array<i64: 176, 128>}, {transform_indices = @transform_2, window_bounds = array<i64: 8, 128>}]} {
    %c0 = arith.constant 0 : index
    %c0_0 = arith.constant 0 : index
    %0 = vector.load %arg1[%c0, %c0_0] : memref<8x32xf32, #tpu.memory_space<vmem>>, vector<8x32xf32>
    %c0_1 = arith.constant 0 : index
    %c0_2 = arith.constant 0 : index
    %1 = vector.load %arg2[%c0_1, %c0_2] : memref<176x128xf32, #tpu.memory_space<vmem>>, vector<32x128xf32>
    %c32 = arith.constant 32 : index
    %c0_3 = arith.constant 0 : index
    %2 = vector.load %arg2[%c32, %c0_3] : memref<176x128xf32, #tpu.memory_space<vmem>>, vector<1x128xf32>
    %c40 = arith.constant 40 : index
    %c0_4 = arith.constant 0 : index
    %3 = vector.load %arg2[%c40, %c0_4] : memref<176x128xf32, #tpu.memory_space<vmem>>, vector<128x128xf32>
    %c168 = arith.constant 168 : index
    %c0_5 = arith.constant 0 : index
    %4 = vector.load %arg2[%c168, %c0_5] : memref<176x128xf32, #tpu.memory_space<vmem>>, vector<1x128xf32>
    %cst = arith.constant dense<0.000000e+00> : vector<8x128xf32>
    %5 = tpu.matmul %0, %1, %cst {dimension_numbers = #tpu.dot_dimension_numbers<[1], [0], [0], [1], [0, 0, 1, 1], [], []>} : vector<8x32xf32>, vector<32x128xf32>, vector<8x128xf32> -> vector<8x128xf32>
    %6 = vector.broadcast %2 : vector<1x128xf32> to vector<8x128xf32>
    %7 = arith.addf %5, %6 : vector<8x128xf32>
    %cst_6 = arith.constant 0.000000e+00 : f32
    %8 = vector.broadcast %cst_6 : f32 to vector<8x128xf32>
    %9 = arith.maximumf %7, %8 : vector<8x128xf32>
    %cst_7 = arith.constant dense<0.000000e+00> : vector<8x128xf32>
    %10 = tpu.matmul %9, %3, %cst_7 {dimension_numbers = #tpu.dot_dimension_numbers<[1], [0], [0], [1], [0, 0, 1, 1], [], []>} : vector<8x128xf32>, vector<128x128xf32>, vector<8x128xf32> -> vector<8x128xf32>
    %11 = vector.broadcast %4 : vector<1x128xf32> to vector<8x128xf32>
    %12 = arith.addf %10, %11 : vector<8x128xf32>
    %13 = tpu.iota {dimensions = array<i32: 1>} : vector<8x128xi32>
    %c8_i32 = arith.constant 8 : i32
    %14 = vector.broadcast %c8_i32 : i32 to vector<8x128xi32>
    %15 = arith.cmpi eq, %13, %14 : vector<8x128xi32>
    %16 = arith.negf %12 : vector<8x128xf32>
    %17 = math.exp %16 : vector<8x128xf32>
    %cst_8 = arith.constant 1.000000e+00 : f32
    %18 = vector.broadcast %cst_8 : f32 to vector<8x128xf32>
    %19 = arith.addf %18, %17 : vector<8x128xf32>
    %20 = arith.divf %18, %19 : vector<8x128xf32>
    %21 = arith.select %15, %20, %12 : vector<8x128xi1>, vector<8x128xf32>
    %c0_9 = arith.constant 0 : index
    %c0_10 = arith.constant 0 : index
    %22 = vector.load %arg3[%c0_9, %c0_10] : memref<8x128xf32, #tpu.memory_space<vmem>>, vector<8x128xf32>
    tpu.vector_store %arg3[%c0_9, %c0_10], %21 {strides = array<i32>} : memref<8x128xf32, #tpu.memory_space<vmem>>, vector<8x128xf32>,
    return
  }
  func.func @transform_0(%arg0: i32) -> (i32, i32) {
    %c0_i32 = arith.constant 0 : i32
    %c0_i32_0 = arith.constant 0 : i32
    return %arg0, %c0_i32 : i32, i32
  }
  func.func @transform_1(%arg0: i32) -> (i32, i32) {
    %c0_i32 = arith.constant 0 : i32
    %c0_i32_0 = arith.constant 0 : i32
    %c0_i32_1 = arith.constant 0 : i32
    return %c0_i32, %c0_i32_0 : i32, i32
  }
  func.func @transform_2(%arg0: i32) -> (i32, i32) {
    %c0_i32 = arith.constant 0 : i32
    %c0_i32_0 = arith.constant 0 : i32
    return %arg0, %c0_i32 : i32, i32
  }
}

</mosaic_0001>

<llo_original>
// kernel: elamd_forward.1
$region0: #{elamd_forward.1}
  #allocation0 [shape = 'u32[]', space=smem, size = 0x4, offset = 0x4, fixed_abs, tag = 'smem constant byte address 0x4 - core index']
  #allocation1 [shape = 'u32[72,128]{1,0:T(1,128)}', space=vmem, size = 0x9000, scoped, tag = 'internal scratch']
  %s0 = inlined_call_operand.hbm [shape: f32[8,32], index: 0, kind: input, shape index: {}]
  %s1 = inlined_call_operand.hbm [shape: f32[176,128], index: 1, kind: input, shape index: {}]
  %s2 = inlined_call_operand.vmem [shape: f32[8,128], index: 2, kind: output, shape index: {}]
  %s3 = sld [smem:[#allocation0]]
  $region26: #{elamd_forward.1} parent=0
    _
  %s5 = ssub.s32 1, %s3
  %s6 = scalar_select 0, %s5, %s3
  $region1: #{elamd_forward.1} parent=0
    #allocation2 [shape = 'u8[4096]{0}', space=vmem, size = 0x1000, scoped, tag = 'input window, operand 0, single buffered']
    #allocation3 [shape = 's32[1]{0}', space=sflag, size = 0x4, scoped, tag = 'scoped memory for elamd_forward.1']
    #allocation4 [shape = 'u8[90112]{0}', space=vmem, size = 0x16000, scoped, tag = 'input window, operand 1, single buffered']
    #allocation5 [shape = 's32[1]{0}', space=sflag, size = 0x4, scoped, tag = 'scoped memory for elamd_forward.1']
    %7 = vsyncpa [#allocation3], 0
    %8 = vsyncpa [#allocation5], 0
    // Predicated region
    $region2: #{elamd_forward.1} parent=1 // pred_check
      _
    $region3: #{elamd_forward.1} parent=1 // pred_check_branch
      %10 = sbr.rel (0) target = $region5
    $region4: #{elamd_forward.1} parent=1 // pred_region
      %12 = vsyncadd [#allocation3], 0
      %s14 = sshll.u32 %s0, 4
      %s15 = int_to_ptr.hbm [resolvable:$true] %s14
      %s16 = sshll.u32 [#allocation2], 4
      %s17 = int_to_ptr.vmem [resolvable:$true] %s16
      %19 = dma.hbm_to_vmem [thread:$0]  %s15, 128, %s17, [#allocation3]
    $region5: #{elamd_forward.1} parent=1 // pred_fallthru
      _
    // Predicated region
    $region6: #{elamd_forward.1} parent=1 // pred_check
      _
    $region7: #{elamd_forward.1} parent=1 // pred_check_branch
      %21 = sbr.rel (0) target = $region9
    $region8: #{elamd_forward.1} parent=1 // pred_region
      %23 = vsyncadd [#allocation5], 0
      %s24 = sshll.u32 %s1, 4
      %s25 = int_to_ptr.hbm [resolvable:$true] %s24
      %s26 = sshll.u32 [#allocation4], 4
      %s27 = int_to_ptr.vmem [resolvable:$true] %s26
      %32 = dma.hbm_to_vmem [thread:$0]  %s25, 2816, %s27, [#allocation5], 128, 128, 8
    $region9: #{elamd_forward.1} parent=1 // pred_fallthru
      _
    // Predicated region
    $region10: #{elamd_forward.1} parent=1 // pred_check
      _
    $region11: #{elamd_forward.1} parent=1 // pred_check_branch
      %34 = sbr.rel (0) target = $region13
    $region12: #{elamd_forward.1} parent=1 // pred_region
      %36 = dma.done [#allocation3], 128
    $region13: #{elamd_forward.1} parent=1 // pred_fallthru
      _
    // Predicated region
    $region14: #{elamd_forward.1} parent=1 // pred_check
      _
    $region15: #{elamd_forward.1} parent=1 // pred_check_branch
      %38 = sbr.rel (0) target = $region17
    $region16: #{elamd_forward.1} parent=1 // pred_region
      %40 = dma.done [#allocation5], 2816
    $region17: #{elamd_forward.1} parent=1 // pred_fallthru
      _
    %v41 = vld [vmem:[#allocation2] sm:$0xff]
    %v42 = vld [vmem:[#allocation4] sm:$0xff]
    %v43 = vld [vmem:[#allocation4 + $0x8] sm:$0xff]
    %v44 = vld [vmem:[#allocation4 + $0x10] sm:$0xff]
    %v45 = vld [vmem:[#allocation4 + $0x18] sm:$0xff]
    %v46 = vld [vmem:[#allocation4 + $0x20] sm:$0x1]
    %v47 = vld [vmem:[#allocation4 + $0x28] sm:$0xff]
    %v48 = vld [vmem:[#allocation4 + $0x30] sm:$0xff]
    %v49 = vld [vmem:[#allocation4 + $0x38] sm:$0xff]
    %v50 = vld [vmem:[#allocation4 + $0x40] sm:$0xff]
    %v51 = vld [vmem:[#allocation4 + $0x48] sm:$0xff]
    %v52 = vld [vmem:[#allocation4 + $0x50] sm:$0xff]
    %v53 = vld [vmem:[#allocation4 + $0x58] sm:$0xff]
    %v54 = vld [vmem:[#allocation4 + $0x60] sm:$0xff]
    %v55 = vld [vmem:[#allocation4 + $0x68] sm:$0xff]
    %v56 = vld [vmem:[#allocation4 + $0x70] sm:$0xff]
    %v57 = vld [vmem:[#allocation4 + $0x78] sm:$0xff]
    %v58 = vld [vmem:[#allocation4 + $0x80] sm:$0xff]
    %v59 = vld [vmem:[#allocation4 + $0x88] sm:$0xff]
    %v60 = vld [vmem:[#allocation4 + $0x90] sm:$0xff]
    %v61 = vld [vmem:[#allocation4 + $0x98] sm:$0xff]
    %v62 = vld [vmem:[#allocation4 + $0xa0] sm:$0xff]
    %v63 = vld [vmem:[#allocation4 + $0xa8] sm:$0x1]
    %v64 = vperm.slane %v46, 0
    %vm65 = vcmask 261120
    %v67 = vsel %vm65, %v41, 0
    %69 = vmatpush.msra.mxu0 0.0
    %70 = vmatpush.msra.mxu0 0.0
    %71 = vmatpush.msra.mxu0 0.0
    %72 = vmatpush.msra.mxu0 0.0
    %73 = vmatpush.msra.mxu0 0.0
    %74 = vmatpush.msra.mxu0 0.0
    %75 = vmatpush.msra.mxu0 0.0
    %76 = vmatpush.msra.mxu0 0.0
    %77 = vmatpush.msra.mxu0 0.0
    %78 = vmatpush.msra.mxu0 0.0
    %79 = vmatpush.msra.mxu0 0.0
    %80 = vmatpush.msra.mxu0 0.0
    %81 = vmatpush.msra.mxu0 %v45
    %82 = vmatpush.msra.mxu0 %v44
    %83 = vmatpush.msra.mxu0 %v43
    %84 = vmatpush.msra.mxu0 %v42
    %85 = vmatmul.f32.gmra.mxu0 %v67
    %v86 = vpop.f32.mrf.mxu0
    %v87 = vadd.f32 %v64, %v86
    %88 = vdwg.mxu0
    %v89 = vmax.f32 %v87, 0.0
    %v90 = vperm.slane %v63, 0
    %91 = vmatpush.msra.mxu0 %v62
    %92 = vmatpush.msra.mxu0 %v61
    %93 = vmatpush.msra.mxu0 %v60
    %94 = vmatpush.msra.mxu0 %v59
    %95 = vmatpush.msra.mxu0 %v58
    %96 = vmatpush.msra.mxu0 %v57
    %97 = vmatpush.msra.mxu0 %v56
    %98 = vmatpush.msra.mxu0 %v55
    %99 = vmatpush.msra.mxu0 %v54
    %100 = vmatpush.msra.mxu0 %v53
    %101 = vmatpush.msra.mxu0 %v52
    %102 = vmatpush.msra.mxu0 %v51
    %103 = vmatpush.msra.mxu0 %v50
    %104 = vmatpush.msra.mxu0 %v49
    %105 = vmatpush.msra.mxu0 %v48
    %106 = vmatpush.msra.mxu0 %v47
    %107 = vmatmul.f32.gmra.mxu0 %v89
    %v108 = vpop.f32.mrf.mxu0
    %v109 = vadd.f32 %v90, %v108
    %110 = vdwg.mxu0
    %v111 = vlaneseq
    %v112 = vand.u32 %v111, 127
    %vm113 = vcmp.eq.s32.totalorder %v112, 8
    %v114 = vxor.u32 %v109, 2147483648
    %v115 = vmul.f32 %v114, 1.442695
    %v116 = vpow.pop %v115
    %v117 = vadd.f32 %v116, 1.0
    %v118 = vrcp.pop %v117
    %v119 = vmul.f32 %v117, %v118
    %v120 = vsub.f32 1.0, %v119
    %v121 = vmul.f32 %v118, %v120
    %v122 = vadd.f32 %v118, %v121
    %vm123 = vweird.f32 %v117
    %vm124 = vweird.f32 %v118
    %vm125 = vmor %vm123, %vm124
    %v126 = vsel %vm125, %v118, %v122
    %v127 = vand.u32 2147483647, %v117
    %vm128 = vcmp.eq.f32.partialorder %v127, 8.507059e+37
    %v129 = vand.u32 %v117, 2147483648
    %v130 = vor.u32 1.1754944e-38, %v129
    %v131 = vsel %vm128, %v130, %v126
    %v132 = vmul.f32 1.0, %v131
    %v133 = vsel %vm113, %v132, %v109
    %134 = vst [vmem:[%s2] sm:$0xff] %v133
    // Predicated region
    $region18: #{elamd_forward.1} parent=1 // pred_check
      _
    $region19: #{elamd_forward.1} parent=1 // pred_check_branch
      %136 = sbr.rel (0) target = $region21
    $region20: #{elamd_forward.1} parent=1 // pred_region
      _
    $region21: #{elamd_forward.1} parent=1 // pred_fallthru
      _
    // Predicated region
    $region22: #{elamd_forward.1} parent=1 // pred_check
      _
    $region23: #{elamd_forward.1} parent=1 // pred_check_branch
      %138 = sbr.rel (0) target = $region25
    $region24: #{elamd_forward.1} parent=1 // pred_region
      _
    $region25: #{elamd_forward.1} parent=1 // pred_fallthru
      _
    %139 = vsyncpa [#allocation3], 1
    %140 = vsyncpa [#allocation5], 1

</llo_original>
